<compile_context>
chip_gen: v7x
topology: tpu7x:2x2x1
jax: 0.10.0
libtpu: 0.0.40
codegen_flags: <defaults>
</compile_context>

<pallas_src>
import functools

import jax
import jax.numpy as jnp
from jax.experimental import pallas as pl
from jax.experimental.pallas import tpu as pltpu

LANE = 128


def _round_up(x, m):
    return (x + m - 1) // m * m


# ---------------------------------------------------------------------------
# Fused Pallas kernel: one invocation == whole network (all layers)
# ---------------------------------------------------------------------------
def _sage_fused_kernel(adj_ref, x0_ref, wcat_ref, scale_ref, shift_ref,
                       out_ref, *, num_layers, c_pad):
    """adj_ref   : [Np, Np]     bf16, row-normalized adjacency (zero-padded)
       x0_ref    : [Np, C]      bf16, padded input features
       wcat_ref  : [L, C, 2C]   bf16, per-layer [lin_l | lin_r] weights (out-dim concat)
       scale_ref : [L, 1, C]    f32,  folded eval-BN scale (ones for last layer)
       shift_ref : [L, 1, C]    f32,  folded BN shift + conv bias (bias only for last)
       out_ref   : [Np, C]      f32,  final layer output
    """
    adj = adj_ref[...]                      # bf16, stays VMEM/vreg resident
    x_bf = x0_ref[...]                      # bf16 activation carry (MXU operand)

    y = None
    # Statically unrolled layer loop: at demo scale, per-grid-step overhead
    # dominates, so one invocation with resident weights is the fast path.
    for li in range(num_layers):
        # One fused MXU pass computes both lin_l and lin_r inputs:
        #   z = x @ [wl | wr]  -> [Np, 2C]  (256-lane output, native MXU tile)
        z = jnp.dot(x_bf, wcat_ref[li], preferred_element_type=jnp.float32)
        # Reassociated SAGE update (adj row-normalized => mean aggregation):
        #   h = adj @ (x @ wl) + x @ wr
        h = (jnp.dot(adj, z[:, :c_pad].astype(jnp.bfloat16),
                     preferred_element_type=jnp.float32)
             + z[:, c_pad:])
        # hidden layers: folded eval-mode BatchNorm (+ conv bias)
        # last layer:    scale = 1, shift = conv bias
        y = h * scale_ref[li] + shift_ref[li]
        if li < num_layers - 1:
            # ReLU; dropout is the identity at inference.
            # TODO(synk): training-mode dropout not implemented.
            x_bf = jnp.maximum(y, 0.0).astype(jnp.bfloat16)

    out_ref[...] = y


# ---------------------------------------------------------------------------
# Wrapper
# ---------------------------------------------------------------------------
@jax.jit
def sage_forward(adj_bf16, x_pad_bf16, wcat_stack, scale_stack, shift_stack):
    n_pad = adj_bf16.shape[0]
    num_layers, c_pad, two_c = wcat_stack.shape
    assert two_c == 2 * c_pad

    kernel = functools.partial(_sage_fused_kernel,
                               num_layers=num_layers, c_pad=c_pad)

    flops = num_layers * (2 * n_pad * c_pad * (2 * c_pad)
                          + 2 * n_pad * n_pad * c_pad)
    bytes_accessed = (adj_bf16.size * 2 + x_pad_bf16.size * 2
                      + wcat_stack.size * 2
                      + scale_stack.size * 4 + shift_stack.size * 4
                      + n_pad * c_pad * 4)

    # Size the VMEM request from the real resident footprint + working set,
    # with headroom; cap below v7x's 64 MiB per-core VMEM.
    resident_bytes = bytes_accessed
    working_bytes = n_pad * (2 * c_pad) * 4 * 2          # z / h / y temporaries
    vmem_limit = int(min(48 * 1024 * 1024,
                         max(8 * 1024 * 1024,
                             2 * (resident_bytes + working_bytes))))
    # TODO(synk): above this, switch to the streamed-adj (HBM + emit_pipeline) path.
    assert resident_bytes + working_bytes < 40 * 1024 * 1024, (
        "graph too large for the fully-resident path; streamed-adj path needed")

    return pl.pallas_call(
        kernel,
        out_shape=jax.ShapeDtypeStruct((n_pad, c_pad), jnp.float32),
        grid_spec=pltpu.PrefetchScalarGridSpec(
            num_scalar_prefetch=0,
            grid=(1,),
            in_specs=[
                pl.BlockSpec((n_pad, n_pad), lambda i: (0, 0)),               # adj
                pl.BlockSpec((n_pad, c_pad), lambda i: (0, 0)),               # x0
                pl.BlockSpec((num_layers, c_pad, 2 * c_pad),
                             lambda i: (0, 0, 0)),                            # [wl|wr] stack
                pl.BlockSpec((num_layers, 1, c_pad), lambda i: (0, 0, 0)),    # scale stack
                pl.BlockSpec((num_layers, 1, c_pad), lambda i: (0, 0, 0)),    # shift stack
            ],
            out_specs=pl.BlockSpec((n_pad, c_pad), lambda i: (0, 0)),
        ),
        compiler_params=pltpu.CompilerParams(
            dimension_semantics=("arbitrary",),
            vmem_limit_bytes=vmem_limit,
        ),
        cost_estimate=pl.CostEstimate(
            flops=flops, transcendentals=0, bytes_accessed=bytes_accessed),
    )(adj_bf16, x_pad_bf16, wcat_stack, scale_stack, shift_stack)


# ---------------------------------------------------------------------------
# Parameter construction (deterministic, mirrors SAGE.__init__ shapes)
# ---------------------------------------------------------------------------
def init_sage_params(key, in_channels, hidden_channels, out_channels,
                     num_layers):
    dims_in = [in_channels] + [hidden_channels] * (num_layers - 1)
    dims_out = [hidden_channels] * (num_layers - 1) + [out_channels]
    c_pad = _round_up(max(dims_in + dims_out), LANE)

    wcat_stack = jnp.zeros((num_layers, c_pad, 2 * c_pad), jnp.float32)
    scale_stack = jnp.ones((num_layers, 1, c_pad), jnp.float32)   # padded lanes -> 1
    shift_stack = jnp.zeros((num_layers, 1, c_pad), jnp.float32)  # padded lanes -> 0
    ref_layers = []

    for li, (cin, cout) in enumerate(zip(dims_in, dims_out)):
        key, k1, k2, k3, k4, k5, k6 = jax.random.split(key, 7)
        glorot = (6.0 / (cin + cout)) ** 0.5
        wl = jax.random.uniform(k1, (cin, cout), jnp.float32, -glorot, glorot)
        wr = jax.random.uniform(k2, (cin, cout), jnp.float32, -glorot, glorot)
        b = jax.random.uniform(k3, (cout,), jnp.float32, -0.1, 0.1)
        layer_ref = {"wl": wl, "wr": wr, "b": b}

        if li < num_layers - 1:
            # BatchNorm1d(hidden) in eval mode, folded (conv bias folded too)
            gamma = 1.0 + 0.1 * jax.random.normal(k4, (cout,), jnp.float32)
            beta = 0.1 * jax.random.normal(k5, (cout,), jnp.float32)
            running_mean = 0.05 * jax.random.normal(k6, (cout,), jnp.float32)
            running_var = jnp.ones((cout,), jnp.float32)
            eps = 1e-5
            bn_scale = gamma / jnp.sqrt(running_var + eps)
            scale = bn_scale
            shift = (b - running_mean) * bn_scale + beta
            layer_ref["scale"] = bn_scale
            layer_ref["shift"] = beta - running_mean * bn_scale
        else:
            scale = jnp.ones((cout,), jnp.float32)
            shift = b

        # Concatenate lin_l | lin_r along the output dim (one wide matmul/layer).
        wcat_stack = wcat_stack.at[li, :cin, :cout].set(wl)
        wcat_stack = wcat_stack.at[li, :cin, c_pad:c_pad + cout].set(wr)
        scale_stack = scale_stack.at[li, 0, :cout].set(scale)
        shift_stack = shift_stack.at[li, 0, :cout].set(shift)
        ref_layers.append(layer_ref)

    params = {
        "wcat": wcat_stack.astype(jnp.bfloat16),
        "scale": scale_stack,
        "shift": shift_stack,
        "c_pad": c_pad,
    }
    return params, ref_layers


# ---------------------------------------------------------------------------
# Pure-JAX reference (eval-mode semantics) for correctness checking
# ---------------------------------------------------------------------------
def sage_reference(ref_layers, x, adj):
    h = x
    n_layers = len(ref_layers)
    for li, layer in enumerate(ref_layers):
        agg = adj @ h
        h_new = agg @ layer["wl"] + h @ layer["wr"] + layer["b"]
        if li < n_layers - 1:
            h_new = h_new * layer["scale"] + layer["shift"]
            h_new = jnp.maximum(h_new, 0.0)
        h = h_new
    return h


if __name__ == "__main__":
    N = 64               # number of graph nodes
    IN_CH = 32
    HIDDEN_CH = 64
    OUT_CH = 16
    NUM_LAYERS = 3
    DROPOUT = 0.5        # unused at inference

    key = jax.random.PRNGKey(0)
    kx, kadj, kparams = jax.random.split(key, 3)

    # node features
    x = jax.random.normal(kx, (N, IN_CH), jnp.float32)

    # random sparse-ish adjacency, row-normalized (mean aggregation like adj_t)
    raw = (jax.random.uniform(kadj, (N, N)) < 0.15).astype(jnp.float32)
    raw = raw + jnp.eye(N, dtype=jnp.float32)  # avoid isolated nodes
    deg = jnp.sum(raw, axis=1, keepdims=True)
    adj = raw / deg

    params, ref_layers = init_sage_params(kparams, IN_CH, HIDDEN_CH, OUT_CH,
                                          NUM_LAYERS)
    c_pad = params["c_pad"]

    # Pad the node dim to a multiple of 128 (zero rows/cols) so the adjacency
    # tile is lane-dense; padded nodes have zero adj columns so they never
    # influence real rows.
    n_pad = _round_up(N, LANE)
    adj_pad = jnp.zeros((n_pad, n_pad), jnp.float32).at[:N, :N].set(adj)
    adj_bf16 = adj_pad.astype(jnp.bfloat16)
    x_pad = jnp.zeros((n_pad, c_pad), jnp.float32).at[:N, :IN_CH].set(x)
    x_pad_bf16 = x_pad.astype(jnp.bfloat16)

    out_pad = sage_forward(adj_bf16, x_pad_bf16, params["wcat"],
                           params["scale"], params["shift"])
    out_pad = jax.block_until_ready(out_pad)
    out = out_pad[:N, :OUT_CH]

    assert out.shape == (N, OUT_CH), out.shape
    assert jnp.all(jnp.isfinite(out))

    # reference on the same bf16-quantized adjacency/weights, f32 math throughout
    ref_layers_q = []
    for lay in ref_layers:
        lq = dict(lay)
        lq["wl"] = lay["wl"].astype(jnp.bfloat16).astype(jnp.float32)
        lq["wr"] = lay["wr"].astype(jnp.bfloat16).astype(jnp.float32)
        ref_layers_q.append(lq)
    ref = sage_reference(ref_layers_q,
                         x_pad_bf16[:N, :IN_CH].astype(jnp.float32),
                         adj_bf16[:N, :N].astype(jnp.float32))
    err = jnp.max(jnp.abs(out - ref))
    assert err < 6e-2, f"max abs err {err}"

    print("KERNEL_OK")
</pallas_src>

<mosaic_0001>
module attributes {stable_mosaic.version = 11 : i64} {
  func.func @_sage_fused_kernel(%arg0: i32, %arg1: memref<128x128xbf16, #tpu.memory_space<vmem>>, %arg2: memref<128x128xbf16, #tpu.memory_space<vmem>>, %arg3: memref<3x128x256xbf16, #tpu.memory_space<vmem>>, %arg4: memref<3x1x128xf32, #tpu.memory_space<vmem>>, %arg5: memref<3x1x128xf32, #tpu.memory_space<vmem>>, %arg6: memref<128x128xf32, #tpu.memory_space<vmem>>) attributes {dimension_semantics = [#tpu.dimension_semantics<arbitrary>], iteration_bounds = array<i64: 1>, scalar_prefetch = 0 : i64, scratch_operands = 0 : i64, tpu.core_type = #tpu.core_type<tc>, window_params = [{pipeline_mode = #tpu.pipeline_mode<synchronous>, transform_indices = @transform_0, window_bounds = array<i64: 128, 128>}, {pipeline_mode = #tpu.pipeline_mode<synchronous>, transform_indices = @transform_1, window_bounds = array<i64: 128, 128>}, {pipeline_mode = #tpu.pipeline_mode<synchronous>, transform_indices = @transform_2, window_bounds = array<i64: 3, 128, 256>}, {pipeline_mode = #tpu.pipeline_mode<synchronous>, transform_indices = @transform_3, window_bounds = array<i64: 3, 1, 128>}, {pipeline_mode = #tpu.pipeline_mode<synchronous>, transform_indices = @transform_4, window_bounds = array<i64: 3, 1, 128>}, {pipeline_mode = #tpu.pipeline_mode<synchronous>, transform_indices = @transform_5, window_bounds = array<i64: 128, 128>}]} {
    %c0 = arith.constant 0 : index
    %c0_0 = arith.constant 0 : index
    %0 = vector.load %arg1[%c0, %c0_0] : memref<128x128xbf16, #tpu.memory_space<vmem>>, vector<128x128xbf16>
    %c0_1 = arith.constant 0 : index
    %c0_2 = arith.constant 0 : index
    %1 = vector.load %arg2[%c0_1, %c0_2] : memref<128x128xbf16, #tpu.memory_space<vmem>>, vector<128x128xbf16>
    %c0_3 = arith.constant 0 : index
    %c0_4 = arith.constant 0 : index
    %c0_5 = arith.constant 0 : index
    %2 = vector.load %arg3[%c0_3, %c0_4, %c0_5] : memref<3x128x256xbf16, #tpu.memory_space<vmem>>, vector<1x128x256xbf16>
    %3 = vector.shape_cast %2 : vector<1x128x256xbf16> to vector<128x256xbf16>
    %cst = arith.constant dense<0.000000e+00> : vector<128x256xf32>
    %4 = tpu.matmul %1, %3, %cst {dimension_numbers = #tpu.dot_dimension_numbers<[1], [0], [0], [1], [0, 0, 1, 1], [], []>} : vector<128x128xbf16>, vector<128x256xbf16>, vector<128x256xf32> -> vector<128x256xf32>
    %5 = vector.extract_strided_slice %4 {offsets = [0, 0], sizes = [128, 128], strides = [1, 1]} : vector<128x256xf32> to vector<128x128xf32>
    %6 = arith.truncf %5 : vector<128x128xf32> to vector<128x128xbf16>
    %cst_6 = arith.constant dense<0.000000e+00> : vector<128x128xf32>
    %7 = tpu.matmul %0, %6, %cst_6 {dimension_numbers = #tpu.dot_dimension_numbers<[1], [0], [0], [1], [0, 0, 1, 1], [], []>} : vector<128x128xbf16>, vector<128x128xbf16>, vector<128x128xf32> -> vector<128x128xf32>
    %8 = vector.extract_strided_slice %4 {offsets = [0, 128], sizes = [128, 128], strides = [1, 1]} : vector<128x256xf32> to vector<128x128xf32>
    %9 = arith.addf %7, %8 : vector<128x128xf32>
    %c0_7 = arith.constant 0 : index
    %c0_8 = arith.constant 0 : index
    %c0_9 = arith.constant 0 : index
    %10 = vector.load %arg4[%c0_7, %c0_8, %c0_9] : memref<3x1x128xf32, #tpu.memory_space<vmem>>, vector<1x1x128xf32>
    %11 = vector.shape_cast %10 : vector<1x1x128xf32> to vector<1x128xf32>
    %12 = vector.broadcast %11 : vector<1x128xf32> to vector<128x128xf32>
    %13 = arith.mulf %9, %12 : vector<128x128xf32>
    %c0_10 = arith.constant 0 : index
    %c0_11 = arith.constant 0 : index
    %c0_12 = arith.constant 0 : index
    %14 = vector.load %arg5[%c0_10, %c0_11, %c0_12] : memref<3x1x128xf32, #tpu.memory_space<vmem>>, vector<1x1x128xf32>
    %15 = vector.shape_cast %14 : vector<1x1x128xf32> to vector<1x128xf32>
    %16 = vector.broadcast %15 : vector<1x128xf32> to vector<128x128xf32>
    %17 = arith.addf %13, %16 : vector<128x128xf32>
    %cst_13 = arith.constant 0.000000e+00 : f32
    %18 = vector.broadcast %cst_13 : f32 to vector<128x128xf32>
    %19 = arith.maximumf %17, %18 : vector<128x128xf32>
    %20 = arith.truncf %19 : vector<128x128xf32> to vector<128x128xbf16>
    %c1 = arith.constant 1 : index
    %c0_14 = arith.constant 0 : index
    %c0_15 = arith.constant 0 : index
    %21 = vector.load %arg3[%c1, %c0_14, %c0_15] : memref<3x128x256xbf16, #tpu.memory_space<vmem>>, vector<1x128x256xbf16>
    %22 = vector.shape_cast %21 : vector<1x128x256xbf16> to vector<128x256xbf16>
    %cst_16 = arith.constant dense<0.000000e+00> : vector<128x256xf32>
    %23 = tpu.matmul %20, %22, %cst_16 {dimension_numbers = #tpu.dot_dimension_numbers<[1], [0], [0], [1], [0, 0, 1, 1], [], []>} : vector<128x128xbf16>, vector<128x256xbf16>, vector<128x256xf32> -> vector<128x256xf32>
    %24 = vector.extract_strided_slice %23 {offsets = [0, 0], sizes = [128, 128], strides = [1, 1]} : vector<128x256xf32> to vector<128x128xf32>
    %25 = arith.truncf %24 : vector<128x128xf32> to vector<128x128xbf16>
    %cst_17 = arith.constant dense<0.000000e+00> : vector<128x128xf32>
    %26 = tpu.matmul %0, %25, %cst_17 {dimension_numbers = #tpu.dot_dimension_numbers<[1], [0], [0], [1], [0, 0, 1, 1], [], []>} : vector<128x128xbf16>, vector<128x128xbf16>, vector<128x128xf32> -> vector<128x128xf32>
    %27 = vector.extract_strided_slice %23 {offsets = [0, 128], sizes = [128, 128], strides = [1, 1]} : vector<128x256xf32> to vector<128x128xf32>
    %28 = arith.addf %26, %27 : vector<128x128xf32>
    %c1_18 = arith.constant 1 : index
    %c0_19 = arith.constant 0 : index
    %c0_20 = arith.constant 0 : index
    %29 = vector.load %arg4[%c1_18, %c0_19, %c0_20] : memref<3x1x128xf32, #tpu.memory_space<vmem>>, vector<1x1x128xf32>
    %30 = vector.shape_cast %29 : vector<1x1x128xf32> to vector<1x128xf32>
    %31 = vector.broadcast %30 : vector<1x128xf32> to vector<128x128xf32>
    %32 = arith.mulf %28, %31 : vector<128x128xf32>
    %c1_21 = arith.constant 1 : index
    %c0_22 = arith.constant 0 : index
    %c0_23 = arith.constant 0 : index
    %33 = vector.load %arg5[%c1_21, %c0_22, %c0_23] : memref<3x1x128xf32, #tpu.memory_space<vmem>>, vector<1x1x128xf32>
    %34 = vector.shape_cast %33 : vector<1x1x128xf32> to vector<1x128xf32>
    %35 = vector.broadcast %34 : vector<1x128xf32> to vector<128x128xf32>
    %36 = arith.addf %32, %35 : vector<128x128xf32>
    %cst_24 = arith.constant 0.000000e+00 : f32
    %37 = vector.broadcast %cst_24 : f32 to vector<128x128xf32>
    %38 = arith.maximumf %36, %37 : vector<128x128xf32>
    %39 = arith.truncf %38 : vector<128x128xf32> to vector<128x128xbf16>
    %c2 = arith.constant 2 : index
    %c0_25 = arith.constant 0 : index
    %c0_26 = arith.constant 0 : index
    %40 = vector.load %arg3[%c2, %c0_25, %c0_26] : memref<3x128x256xbf16, #tpu.memory_space<vmem>>, vector<1x128x256xbf16>
    %41 = vector.shape_cast %40 : vector<1x128x256xbf16> to vector<128x256xbf16>
    %cst_27 = arith.constant dense<0.000000e+00> : vector<128x256xf32>
    %42 = tpu.matmul %39, %41, %cst_27 {dimension_numbers = #tpu.dot_dimension_numbers<[1], [0], [0], [1], [0, 0, 1, 1], [], []>} : vector<128x128xbf16>, vector<128x256xbf16>, vector<128x256xf32> -> vector<128x256xf32>
    %43 = vector.extract_strided_slice %42 {offsets = [0, 0], sizes = [128, 128], strides = [1, 1]} : vector<128x256xf32> to vector<128x128xf32>
    %44 = arith.truncf %43 : vector<128x128xf32> to vector<128x128xbf16>
    %cst_28 = arith.constant dense<0.000000e+00> : vector<128x128xf32>
    %45 = tpu.matmul %0, %44, %cst_28 {dimension_numbers = #tpu.dot_dimension_numbers<[1], [0], [0], [1], [0, 0, 1, 1], [], []>} : vector<128x128xbf16>, vector<128x128xbf16>, vector<128x128xf32> -> vector<128x128xf32>
    %46 = vector.extract_strided_slice %42 {offsets = [0, 128], sizes = [128, 128], strides = [1, 1]} : vector<128x256xf32> to vector<128x128xf32>
    %47 = arith.addf %45, %46 : vector<128x128xf32>
    %c2_29 = arith.constant 2 : index
    %c0_30 = arith.constant 0 : index
    %c0_31 = arith.constant 0 : index
    %48 = vector.load %arg4[%c2_29, %c0_30, %c0_31] : memref<3x1x128xf32, #tpu.memory_space<vmem>>, vector<1x1x128xf32>
    %49 = vector.shape_cast %48 : vector<1x1x128xf32> to vector<1x128xf32>
    %50 = vector.broadcast %49 : vector<1x128xf32> to vector<128x128xf32>
    %51 = arith.mulf %47, %50 : vector<128x128xf32>
    %c2_32 = arith.constant 2 : index
    %c0_33 = arith.constant 0 : index
    %c0_34 = arith.constant 0 : index
    %52 = vector.load %arg5[%c2_32, %c0_33, %c0_34] : memref<3x1x128xf32, #tpu.memory_space<vmem>>, vector<1x1x128xf32>
    %53 = vector.shape_cast %52 : vector<1x1x128xf32> to vector<1x128xf32>
    %54 = vector.broadcast %53 : vector<1x128xf32> to vector<128x128xf32>
    %55 = arith.addf %51, %54 : vector<128x128xf32>
    %c0_35 = arith.constant 0 : index
    %c0_36 = arith.constant 0 : index
    %56 = vector.load %arg6[%c0_35, %c0_36] : memref<128x128xf32, #tpu.memory_space<vmem>>, vector<128x128xf32>
    tpu.vector_store %arg6[%c0_35, %c0_36], %55 {strides = array<i32>} : memref<128x128xf32, #tpu.memory_space<vmem>>, vector<128x128xf32>,
    return
  }
  func.func @transform_0(%arg0: i32) -> (i32, i32) {
    %c0_i32 = arith.constant 0 : i32
    %c0_i32_0 = arith.constant 0 : i32
    %c0_i32_1 = arith.constant 0 : i32
    return %c0_i32, %c0_i32_0 : i32, i32
  }
  func.func @transform_1(%arg0: i32) -> (i32, i32) {
    %c0_i32 = arith.constant 0 : i32
    %c0_i32_0 = arith.constant 0 : i32
    %c0_i32_1 = arith.constant 0 : i32
    return %c0_i32, %c0_i32_0 : i32, i32
  }
  func.func @transform_2(%arg0: i32) -> (i32, i32, i32) {
    %c0_i32 = arith.constant 0 : i32
    %c0_i32_0 = arith.constant 0 : i32
    %c0_i32_1 = arith.constant 0 : i32
    %c0_i32_2 = arith.constant 0 : i32
    return %c0_i32, %c0_i32_0, %c0_i32_1 : i32, i32, i32
  }
  func.func @transform_3(%arg0: i32) -> (i32, i32, i32) {
    %c0_i32 = arith.constant 0 : i32
    %c0_i32_0 = arith.constant 0 : i32
    %c0_i32_1 = arith.constant 0 : i32
    %c0_i32_2 = arith.constant 0 : i32
    return %c0_i32, %c0_i32_0, %c0_i32_1 : i32, i32, i32
  }
  func.func @transform_4(%arg0: i32) -> (i32, i32, i32) {
    %c0_i32 = arith.constant 0 : i32
    %c0_i32_0 = arith.constant 0 : i32
    %c0_i32_1 = arith.constant 0 : i32
    %c0_i32_2 = arith.constant 0 : i32
    return %c0_i32, %c0_i32_0, %c0_i32_1 : i32, i32, i32
  }
  func.func @transform_5(%arg0: i32) -> (i32, i32) {
    %c0_i32 = arith.constant 0 : i32
    %c0_i32_0 = arith.constant 0 : i32
    %c0_i32_1 = arith.constant 0 : i32
    return %c0_i32, %c0_i32_0 : i32, i32
  }
}

</mosaic_0001>

<llo_original>
// kernel: sage_forward.1
$region0: #{sage_forward.1}
  #allocation0 [shape = 'u32[]', space=smem, size = 0x4, offset = 0x4, fixed_abs, tag = 'smem constant byte address 0x4 - core index']
  #allocation1 [shape = 'u32[144,128]{1,0:T(1,128)}', space=vmem, size = 0x12000, scoped, tag = 'internal scratch']
  %s0 = inlined_call_operand.hbm [shape: bf16[128,128], index: 0, kind: input, shape index: {}]
  %s1 = inlined_call_operand.hbm [shape: bf16[128,128], index: 1, kind: input, shape index: {}]
  %s2 = inlined_call_operand.hbm [shape: bf16[3,128,256], index: 2, kind: input, shape index: {}]
  %s3 = inlined_call_operand.vmem [shape: f32[3,1,128], index: 3, kind: input, shape index: {}]
  %s4 = inlined_call_operand.vmem [shape: f32[3,1,128], index: 4, kind: input, shape index: {}]
  %s5 = inlined_call_operand.hbm [shape: f32[128,128], index: 5, kind: output, shape index: {}]
  %s6 = sld [smem:[#allocation0]]
  $region42: #{sage_forward.1} parent=0
    _
  %s8 = ssub.s32 1, %s6
  %s9 = scalar_select 0, %s8, %s6
  $region1: #{sage_forward.1} parent=0
    #allocation2 [shape = 'u8[32768]{0}', space=vmem, size = 0x8000, scoped, tag = 'input window, operand 0, single buffered']
    #allocation3 [shape = 's32[1]{0}', space=sflag, size = 0x4, scoped, tag = 'scoped memory for sage_forward.1']
    #allocation4 [shape = 's32[1]{0}', space=sflag, size = 0x4, scoped, tag = 'scoped memory for sage_forward.1']
    #allocation5 [shape = 'u8[32768]{0}', space=vmem, size = 0x8000, scoped, tag = 'input window, operand 1, single buffered']
    #allocation6 [shape = 's32[1]{0}', space=sflag, size = 0x4, scoped, tag = 'scoped memory for sage_forward.1']
    #allocation7 [shape = 'u8[196608]{0}', space=vmem, size = 0x30000, scoped, tag = 'input window, operand 2, single buffered']
    #allocation8 [shape = 'u8[65536]{0}', space=vmem, size = 0x10000, scoped, tag = 'output window, operand 0, single buffered']
    %10 = vsyncpa [#allocation3], 0
    %11 = vsyncpa [#allocation6], 0
    %12 = vsyncpa [#allocation4], 0
    // Predicated region
    $region2: #{sage_forward.1} parent=1 // pred_check
      _
    $region3: #{sage_forward.1} parent=1 // pred_check_branch
      %14 = sbr.rel (0) target = $region5
    $region4: #{sage_forward.1} parent=1 // pred_region
      %s16 = ssub.s32 1024, 1024
      %17 = vsyncadd [#allocation3], %s16
      %s18 = sshll.u32 [#allocation2], 4
      %s19 = int_to_ptr.vmem [resolvable:$true] %s18
      %24 = dma.hbm_to_vmem [thread:$0]  %s0, 1024, %s19, [#allocation3], 64, 64, 4
    $region5: #{sage_forward.1} parent=1 // pred_fallthru
      _
    // Predicated region
    $region6: #{sage_forward.1} parent=1 // pred_check
      _
    $region7: #{sage_forward.1} parent=1 // pred_check_branch
      %26 = sbr.rel (0) target = $region9
    $region8: #{sage_forward.1} parent=1 // pred_region
      %s28 = ssub.s32 1024, 1024
      %29 = vsyncadd [#allocation6], %s28
      %s30 = sshll.u32 [#allocation5], 4
      %s31 = int_to_ptr.vmem [resolvable:$true] %s30
      %36 = dma.hbm_to_vmem [thread:$0]  %s1, 1024, %s31, [#allocation6], 64, 64, 4
    $region9: #{sage_forward.1} parent=1 // pred_fallthru
      _
    // Predicated region
    $region10: #{sage_forward.1} parent=1 // pred_check
      _
    $region11: #{sage_forward.1} parent=1 // pred_check_branch
      %38 = sbr.rel (0) target = $region13
    $region12: #{sage_forward.1} parent=1 // pred_region
      %s40 = ssub.s32 6144, 6144
      %41 = vsyncadd [#allocation6], %s40
      %s42 = sshll.u32 [#allocation7], 4
      %s43 = int_to_ptr.vmem [resolvable:$true] %s42
      %48 = dma.hbm_to_vmem [thread:$0]  %s2, 6144, %s43, [#allocation6], 128, 128, 8
    $region13: #{sage_forward.1} parent=1 // pred_fallthru
      _
    // Predicated region
    $region14: #{sage_forward.1} parent=1 // pred_check
      _
    $region15: #{sage_forward.1} parent=1 // pred_check_branch
      %50 = sbr.rel (0) target = $region17
    $region16: #{sage_forward.1} parent=1 // pred_region
      _
    $region17: #{sage_forward.1} parent=1 // pred_fallthru
      _
    // Predicated region
    $region18: #{sage_forward.1} parent=1 // pred_check
      _
    $region19: #{sage_forward.1} parent=1 // pred_check_branch
      %52 = sbr.rel (0) target = $region21
    $region20: #{sage_forward.1} parent=1 // pred_region
      _
    $region21: #{sage_forward.1} parent=1 // pred_fallthru
      _
    // Predicated region
    $region22: #{sage_forward.1} parent=1 // pred_check
      _
    $region23: #{sage_forward.1} parent=1 // pred_check_branch
      %54 = sbr.rel (0) target = $region25
    $region24: #{sage_forward.1} parent=1 // pred_region
      %55 = dma.done [#allocation3], 1024
    $region25: #{sage_forward.1} parent=1 // pred_fallthru
      _
    // Predicated region
    $region26: #{sage_forward.1} parent=1 // pred_check
      _
    $region27: #{sage_forward.1} parent=1 // pred_check_branch
      %57 = sbr.rel (0) target = $region29
    $region28: #{sage_forward.1} parent=1 // pred_region
      %58 = dma.done [#allocation6], 1024
    $region29: #{sage_forward.1} parent=1 // pred_fallthru
      _
    // Predicated region
    $region30: #{sage_forward.1} parent=1 // pred_check
      _
    $region31: #{sage_forward.1} parent=1 // pred_check_branch
      %60 = sbr.rel (0) target = $region33
    $region32: #{sage_forward.1} parent=1 // pred_region
      %61 = dma.done [#allocation6], 6144
    $region33: #{sage_forward.1} parent=1 // pred_fallthru
      _
    %v63 = vld [vmem:[#allocation2] sm:$0xf]
    %v64 = vld [vmem:[#allocation2 + $0x4] sm:$0xf]
    %v65 = vld [vmem:[#allocation2 + $0x8] sm:$0xf]
    %v66 = vld [vmem:[#allocation2 + $0xc] sm:$0xf]
    %v67 = vld [vmem:[#allocation2 + $0x10] sm:$0xf]
    %v68 = vld [vmem:[#allocation2 + $0x14] sm:$0xf]
    %v69 = vld [vmem:[#allocation2 + $0x18] sm:$0xf]
    %v70 = vld [vmem:[#allocation2 + $0x1c] sm:$0xf]
    %v71 = vld [vmem:[#allocation2 + $0x20] sm:$0xf]
    %v72 = vld [vmem:[#allocation2 + $0x24] sm:$0xf]
    %v73 = vld [vmem:[#allocation2 + $0x28] sm:$0xf]
    %v74 = vld [vmem:[#allocation2 + $0x2c] sm:$0xf]
    %v75 = vld [vmem:[#allocation2 + $0x30] sm:$0xf]
    %v76 = vld [vmem:[#allocation2 + $0x34] sm:$0xf]
    %v77 = vld [vmem:[#allocation2 + $0x38] sm:$0xf]
    %v78 = vld [vmem:[#allocation2 + $0x3c] sm:$0xf]
    %v79 = vld [vmem:[#allocation5] sm:$0xf]
    %v80 = vld [vmem:[#allocation5 + $0x4] sm:$0xf]
    %v81 = vld [vmem:[#allocation5 + $0x8] sm:$0xf]
    %v82 = vld [vmem:[#allocation5 + $0xc] sm:$0xf]
    %v83 = vld [vmem:[#allocation5 + $0x10] sm:$0xf]
    %v84 = vld [vmem:[#allocation5 + $0x14] sm:$0xf]
    %v85 = vld [vmem:[#allocation5 + $0x18] sm:$0xf]
    %v86 = vld [vmem:[#allocation5 + $0x1c] sm:$0xf]
    %v87 = vld [vmem:[#allocation5 + $0x20] sm:$0xf]
    %v88 = vld [vmem:[#allocation5 + $0x24] sm:$0xf]
    %v89 = vld [vmem:[#allocation5 + $0x28] sm:$0xf]
    %v90 = vld [vmem:[#allocation5 + $0x2c] sm:$0xf]
    %v91 = vld [vmem:[#allocation5 + $0x30] sm:$0xf]
    %v92 = vld [vmem:[#allocation5 + $0x34] sm:$0xf]
    %v93 = vld [vmem:[#allocation5 + $0x38] sm:$0xf]
    %v94 = vld [vmem:[#allocation5 + $0x3c] sm:$0xf]
    %v95 = vld [vmem:[#allocation7] sm:$0xff]
    %v96 = vld [vmem:[#allocation7 + $0x8] sm:$0xff]
    %v97 = vld [vmem:[#allocation7 + $0x10] sm:$0xff]
    %v98 = vld [vmem:[#allocation7 + $0x18] sm:$0xff]
    %v99 = vld [vmem:[#allocation7 + $0x20] sm:$0xff]
    %v100 = vld [vmem:[#allocation7 + $0x28] sm:$0xff]
    %v101 = vld [vmem:[#allocation7 + $0x30] sm:$0xff]
    %v102 = vld [vmem:[#allocation7 + $0x38] sm:$0xff]
    %v103 = vld [vmem:[#allocation7 + $0x40] sm:$0xff]
    %v104 = vld [vmem:[#allocation7 + $0x48] sm:$0xff]
    %v105 = vld [vmem:[#allocation7 + $0x50] sm:$0xff]
    %v106 = vld [vmem:[#allocation7 + $0x58] sm:$0xff]
    %v107 = vld [vmem:[#allocation7 + $0x60] sm:$0xff]
    %v108 = vld [vmem:[#allocation7 + $0x68] sm:$0xff]
    %v109 = vld [vmem:[#allocation7 + $0x70] sm:$0xff]
    %v110 = vld [vmem:[#allocation7 + $0x78] sm:$0xff]
    %v127 = vunpack.c.l.b16 %v79
    %v128 = vunpack.c.l.b16 %v80
    %v129 = vunpack.c.l.b16 %v81
    %v130 = vunpack.c.l.b16 %v82
    %v131 = vunpack.c.l.b16 %v83
    %v132 = vunpack.c.l.b16 %v84
    %v133 = vunpack.c.l.b16 %v85
    %v134 = vunpack.c.l.b16 %v86
    %v135 = vunpack.c.l.b16 %v87
    %v136 = vunpack.c.l.b16 %v88
    %v137 = vunpack.c.l.b16 %v89
    %v138 = vunpack.c.l.b16 %v90
    %v139 = vunpack.c.l.b16 %v91
    %v140 = vunpack.c.l.b16 %v92
    %v141 = vunpack.c.l.b16 %v93
    %v142 = vunpack.c.l.b16 %v94
    %v143 = vpack.c.b16 %v128, %v127
    %v144 = vpack.c.b16 %v130, %v129
    %v145 = vpack.c.b16 %v132, %v131
    %v146 = vpack.c.b16 %v134, %v133
    %v147 = vpack.c.b16 %v136, %v135
    %v148 = vpack.c.b16 %v138, %v137
    %v149 = vpack.c.b16 %v140, %v139
    %v150 = vpack.c.b16 %v142, %v141
    %v175 = vunpack.c.l.b16 %v95
    %v176 = vunpack.c.h.b16 %v95
    %v177 = vunpack.c.l.b16 %v96
    %v178 = vunpack.c.h.b16 %v96
    %v179 = vunpack.c.l.b16 %v97
    %v180 = vunpack.c.h.b16 %v97
    %v181 = vunpack.c.l.b16 %v98
    %v182 = vunpack.c.h.b16 %v98
    %v183 = vunpack.c.l.b16 %v99
    %v184 = vunpack.c.h.b16 %v99
    %v185 = vunpack.c.l.b16 %v100
    %v186 = vunpack.c.h.b16 %v100
    %v187 = vunpack.c.l.b16 %v101
    %v188 = vunpack.c.h.b16 %v101
    %v189 = vunpack.c.l.b16 %v102
    %v190 = vunpack.c.h.b16 %v102
    %v191 = vunpack.c.l.b16 %v103
    %v192 = vunpack.c.h.b16 %v103
    %v193 = vunpack.c.l.b16 %v104
    %v194 = vunpack.c.h.b16 %v104
    %v195 = vunpack.c.l.b16 %v105
    %v196 = vunpack.c.h.b16 %v105
    %v197 = vunpack.c.l.b16 %v106
    %v198 = vunpack.c.h.b16 %v106
    %v199 = vunpack.c.l.b16 %v107
    %v200 = vunpack.c.h.b16 %v107
    %v201 = vunpack.c.l.b16 %v108
    %v202 = vunpack.c.h.b16 %v108
    %v203 = vunpack.c.l.b16 %v109
    %v204 = vunpack.c.h.b16 %v109
    %v205 = vunpack.c.l.b16 %v110
    %v206 = vunpack.c.h.b16 %v110
    %v207 = vpack.c.b16 %v177, %v175
    %v208 = vpack.c.b16 %v178, %v176
    %v209 = vpack.c.b16 %v181, %v179
    %v210 = vpack.c.b16 %v182, %v180
    %v211 = vpack.c.b16 %v185, %v183
    %v212 = vpack.c.b16 %v186, %v184
    %v213 = vpack.c.b16 %v189, %v187
    %v214 = vpack.c.b16 %v190, %v188
    %v215 = vpack.c.b16 %v193, %v191
    %v216 = vpack.c.b16 %v194, %v192
    %v217 = vpack.c.b16 %v197, %v195
    %v218 = vpack.c.b16 %v198, %v196
    %v219 = vpack.c.b16 %v201, %v199
    %v220 = vpack.c.b16 %v202, %v200
    %v221 = vpack.c.b16 %v205, %v203
    %v222 = vpack.c.b16 %v206, %v204
    %239 = vmatprep.subr.bf16.mxu0 %v208
    %240 = vmatpush1.bf16.msra.mxu0 %v207
    %241 = vmatprep.subr.bf16.mxu0 %v210
    %242 = vmatpush1.bf16.msra.mxu0 %v209
    %243 = vmatprep.subr.bf16.mxu0 %v212
    %244 = vmatpush1.bf16.msra.mxu0 %v211
    %245 = vmatprep.subr.bf16.mxu0 %v214
    %246 = vmatpush1.bf16.msra.mxu0 %v213
    %247 = vmatprep.subr.bf16.mxu0 %v216
    %248 = vmatpush1.bf16.msra.mxu0 %v215
    %249 = vmatprep.subr.bf16.mxu0 %v218
    %250 = vmatpush1.bf16.msra.mxu0 %v217
    %251 = vmatprep.subr.bf16.mxu0 %v220
    %252 = vmatpush1.bf16.msra.mxu0 %v219
    %253 = vmatprep.subr.bf16.mxu0 %v222
    %254 = vmatpush1.bf16.msra.mxu0 %v221
    %255 = vmatprep.subr.bf16.mxu0 0
    %256 = vmatpush1.bf16.msra.mxu0 0
    %257 = vmatprep.subr.bf16.mxu0 0
    %258 = vmatpush1.bf16.msra.mxu0 0
    %259 = vmatprep.subr.bf16.mxu0 0
    %260 = vmatpush1.bf16.msra.mxu0 0
    %261 = vmatprep.subr.bf16.mxu0 0
    %262 = vmatpush1.bf16.msra.mxu0 0
    %263 = vmatprep.subr.bf16.mxu0 0
    %264 = vmatpush1.bf16.msra.mxu0 0
    %265 = vmatprep.subr.bf16.mxu0 0
    %266 = vmatpush1.bf16.msra.mxu0 0
    %267 = vmatprep.subr.bf16.mxu0 0
    %268 = vmatpush1.bf16.msra.mxu0 0
    %269 = vmatprep.subr.bf16.mxu0 0
    %270 = vmatpush1.bf16.msra.mxu0 0
    %271 = vmatprep.mubr.bf16.mxu0 0
    %272 = vmatmul.mubr.bf16.gmra.mrb[0].mxu0 %v143
    %v273 = vpop.f32.mrb[0].mxu0
    %v274 = vadd.f32 0.0, %v273
    %v275 = vpop.f32.mrb[0].mxu0
    %v276 = vadd.f32 0.0, %v275
    %v277 = vpop.f32.mrb[0].mxu0
    %v278 = vadd.f32 0.0, %v277
    %v279 = vpop.f32.mrb[0].mxu0
    %v280 = vadd.f32 0.0, %v279
    %281 = vmatprep.mubr.bf16.mxu0 0
    %282 = vmatmul.mubr.bf16.gmra.mrb[0].mxu0 %v144
    %v283 = vpop.f32.mrb[0].mxu0
    %v284 = vadd.f32 0.0, %v283
    %v285 = vpop.f32.mrb[0].mxu0
    %v286 = vadd.f32 0.0, %v285
    %v287 = vpop.f32.mrb[0].mxu0
    %v288 = vadd.f32 0.0, %v287
    %v289 = vpop.f32.mrb[0].mxu0
    %v290 = vadd.f32 0.0, %v289
    %291 = vmatprep.mubr.bf16.mxu0 0
    %292 = vmatmul.mubr.bf16.gmra.mrb[0].mxu0 %v145
    %v293 = vpop.f32.mrb[0].mxu0
    %v294 = vadd.f32 0.0, %v293
    %v295 = vpop.f32.mrb[0].mxu0
    %v296 = vadd.f32 0.0, %v295
    %v297 = vpop.f32.mrb[0].mxu0
    %v298 = vadd.f32 0.0, %v297
    %v299 = vpop.f32.mrb[0].mxu0
    %v300 = vadd.f32 0.0, %v299
    %301 = vmatprep.mubr.bf16.mxu0 0
    %302 = vmatmul.mubr.bf16.gmra.mrb[0].mxu0 %v146
    %v303 = vpop.f32.mrb[0].mxu0
    %v304 = vadd.f32 0.0, %v303
    %v305 = vpop.f32.mrb[0].mxu0
    %v306 = vadd.f32 0.0, %v305
    %v307 = vpop.f32.mrb[0].mxu0
    %v308 = vadd.f32 0.0, %v307
    %v309 = vpop.f32.mrb[0].mxu0
    %v310 = vadd.f32 0.0, %v309
    %311 = vmatprep.mubr.bf16.mxu0 0
    %312 = vmatmul.mubr.bf16.gmra.mrb[0].mxu0 %v147
    %v313 = vpop.f32.mrb[0].mxu0
    %v314 = vadd.f32 0.0, %v313
    %v315 = vpop.f32.mrb[0].mxu0
    %v316 = vadd.f32 0.0, %v315
    %v317 = vpop.f32.mrb[0].mxu0
    %v318 = vadd.f32 0.0, %v317
    %v319 = vpop.f32.mrb[0].mxu0
    %v320 = vadd.f32 0.0, %v319
    %321 = vmatprep.mubr.bf16.mxu0 0
    %322 = vmatmul.mubr.bf16.gmra.mrb[0].mxu0 %v148
    %v323 = vpop.f32.mrb[0].mxu0
    %v324 = vadd.f32 0.0, %v323
    %v325 = vpop.f32.mrb[0].mxu0
    %v326 = vadd.f32 0.0, %v325
    %v327 = vpop.f32.mrb[0].mxu0
    %v328 = vadd.f32 0.0, %v327
    %v329 = vpop.f32.mrb[0].mxu0
    %v330 = vadd.f32 0.0, %v329
    %331 = vmatprep.mubr.bf16.mxu0 0
    %332 = vmatmul.mubr.bf16.gmra.mrb[0].mxu0 %v149
    %v333 = vpop.f32.mrb[0].mxu0
    %v334 = vadd.f32 0.0, %v333
    %v335 = vpop.f32.mrb[0].mxu0
    %v336 = vadd.f32 0.0, %v335
    %v337 = vpop.f32.mrb[0].mxu0
    %v338 = vadd.f32 0.0, %v337
    %v339 = vpop.f32.mrb[0].mxu0
    %v340 = vadd.f32 0.0, %v339
    %341 = vmatprep.mubr.bf16.mxu0 0
    %342 = vmatmul.mubr.bf16.gmra.mrb[0].mxu0 %v150
    %v343 = vpop.f32.mrb[0].mxu0
    %v344 = vadd.f32 0.0, %v343
    %v345 = vpop.f32.mrb[0].mxu0
    %v346 = vadd.f32 0.0, %v345
    %v347 = vpop.f32.mrb[0].mxu0
    %v348 = vadd.f32 0.0, %v347
    %v349 = vpop.f32.mrb[0].mxu0
    %v350 = vadd.f32 0.0, %v349
    %351 = vdwg.mxu0
    %v352 = vpack.c.bf16 %v278, %v274
    %v353 = vpack.c.bf16 %v288, %v284
    %v354 = vpack.c.bf16 %v298, %v294
    %v355 = vpack.c.bf16 %v308, %v304
    %v356 = vpack.c.bf16 %v318, %v314
    %v357 = vpack.c.bf16 %v328, %v324
    %v358 = vpack.c.bf16 %v338, %v334
    %v359 = vpack.c.bf16 %v348, %v344
    %v376 = vunpack.c.l.b16 %v63
    %v377 = vunpack.c.l.b16 %v64
    %v378 = vunpack.c.l.b16 %v65
    %v379 = vunpack.c.l.b16 %v66
    %v380 = vunpack.c.l.b16 %v67
    %v381 = vunpack.c.l.b16 %v68
    %v382 = vunpack.c.l.b16 %v69
    %v383 = vunpack.c.l.b16 %v70
    %v384 = vunpack.c.l.b16 %v71
    %v385 = vunpack.c.l.b16 %v72
    %v386 = vunpack.c.l.b16 %v73
    %v387 = vunpack.c.l.b16 %v74
    %v388 = vunpack.c.l.b16 %v75
    %v389 = vunpack.c.l.b16 %v76
    %v390 = vunpack.c.l.b16 %v77
    %v391 = vunpack.c.l.b16 %v78
    %v392 = vpack.c.b16 %v377, %v376
    %v393 = vpack.c.b16 %v379, %v378
    %v394 = vpack.c.b16 %v381, %v380
    %v395 = vpack.c.b16 %v383, %v382
    %v396 = vpack.c.b16 %v385, %v384
    %v397 = vpack.c.b16 %v387, %v386
    %v398 = vpack.c.b16 %v389, %v388
    %v399 = vpack.c.b16 %v391, %v390
    %408 = vmatprep.subr.bf16.mxu0 0
    %409 = vmatpush1.bf16.msra.mxu0 %v352
    %410 = vmatprep.subr.bf16.mxu0 0
    %411 = vmatpush1.bf16.msra.mxu0 %v353
    %412 = vmatprep.subr.bf16.mxu0 0
    %413 = vmatpush1.bf16.msra.mxu0 %v354
    %414 = vmatprep.subr.bf16.mxu0 0
    %415 = vmatpush1.bf16.msra.mxu0 %v355
    %416 = vmatprep.subr.bf16.mxu0 0
    %417 = vmatpush1.bf16.msra.mxu0 %v356
    %418 = vmatprep.subr.bf16.mxu0 0
    %419 = vmatpush1.bf16.msra.mxu0 %v357
    %420 = vmatprep.subr.bf16.mxu0 0
    %421 = vmatpush1.bf16.msra.mxu0 %v358
    %422 = vmatprep.subr.bf16.mxu0 0
    %423 = vmatpush1.bf16.msra.mxu0 %v359
    %424 = vmatprep.subr.bf16.mxu0 0
    %425 = vmatpush1.bf16.msra.mxu0 0
    %426 = vmatprep.subr.bf16.mxu0 0
    %427 = vmatpush1.bf16.msra.mxu0 0
    %428 = vmatprep.subr.bf16.mxu0 0
    %429 = vmatpush1.bf16.msra.mxu0 0
    %430 = vmatprep.subr.bf16.mxu0 0
    %431 = vmatpush1.bf16.msra.mxu0 0
    %432 = vmatprep.subr.bf16.mxu0 0
    %433 = vmatpush1.bf16.msra.mxu0 0
    %434 = vmatprep.subr.bf16.mxu0 0
    %435 = vmatpush1.bf16.msra.mxu0 0
    %436 = vmatprep.subr.bf16.mxu0 0
    %437 = vmatpush1.bf16.msra.mxu0 0
    %438 = vmatprep.subr.bf16.mxu0 0
    %439 = vmatpush1.bf16.msra.mxu0 0
    %440 = vmatprep.mubr.bf16.mxu0 0
    %441 = vmatmul.mubr.bf16.gmra.mrb[0].mxu0 %v392
    %v442 = vpop.f32.mrb[0].mxu0
    %v443 = vadd.f32 %v276, %v442
    %v444 = vpop.f32.mrb[0].mxu0
    %v445 = vpop.f32.mrb[0].mxu0
    %v446 = vadd.f32 %v280, %v445
    %v447 = vpop.f32.mrb[0].mxu0
    %448 = vmatprep.mubr.bf16.mxu0 0
    %449 = vmatmul.mubr.bf16.gmra.mrb[0].mxu0 %v393
    %v450 = vpop.f32.mrb[0].mxu0
    %v451 = vadd.f32 %v286, %v450
    %v452 = vpop.f32.mrb[0].mxu0
    %v453 = vpop.f32.mrb[0].mxu0
    %v454 = vadd.f32 %v290, %v453
    %v455 = vpop.f32.mrb[0].mxu0
    %456 = vmatprep.mubr.bf16.mxu0 0
    %457 = vmatmul.mubr.bf16.gmra.mrb[0].mxu0 %v394
    %v458 = vpop.f32.mrb[0].mxu0
    %v459 = vadd.f32 %v296, %v458
    %v460 = vpop.f32.mrb[0].mxu0
    %v461 = vpop.f32.mrb[0].mxu0
    %v462 = vadd.f32 %v300, %v461
    %v463 = vpop.f32.mrb[0].mxu0
    %464 = vmatprep.mubr.bf16.mxu0 0
    %465 = vmatmul.mubr.bf16.gmra.mrb[0].mxu0 %v395
    %v466 = vpop.f32.mrb[0].mxu0
    %v467 = vadd.f32 %v306, %v466
    %v468 = vpop.f32.mrb[0].mxu0
    %v469 = vpop.f32.mrb[0].mxu0
    %v470 = vadd.f32 %v310, %v469
    %v471 = vpop.f32.mrb[0].mxu0
    %472 = vmatprep.mubr.bf16.mxu0 0
    %473 = vmatmul.mubr.bf16.gmra.mrb[0].mxu0 %v396
    %v474 = vpop.f32.mrb[0].mxu0
    %v475 = vadd.f32 %v316, %v474
    %v476 = vpop.f32.mrb[0].mxu0
    %v477 = vpop.f32.mrb[0].mxu0
    %v478 = vadd.f32 %v320, %v477
    %v479 = vpop.f32.mrb[0].mxu0
    %480 = vmatprep.mubr.bf16.mxu0 0
    %481 = vmatmul.mubr.bf16.gmra.mrb[0].mxu0 %v397
    %v482 = vpop.f32.mrb[0].mxu0
    %v483 = vadd.f32 %v326, %v482
    %v484 = vpop.f32.mrb[0].mxu0
    %v485 = vpop.f32.mrb[0].mxu0
    %v486 = vadd.f32 %v330, %v485
    %v487 = vpop.f32.mrb[0].mxu0
    %488 = vmatprep.mubr.bf16.mxu0 0
    %489 = vmatmul.mubr.bf16.gmra.mrb[0].mxu0 %v398
    %v490 = vpop.f32.mrb[0].mxu0
    %v491 = vadd.f32 %v336, %v490
    %v492 = vpop.f32.mrb[0].mxu0
    %v493 = vpop.f32.mrb[0].mxu0
    %v494 = vadd.f32 %v340, %v493
    %v495 = vpop.f32.mrb[0].mxu0
    %496 = vmatprep.mubr.bf16.mxu0 0
    %497 = vmatmul.mubr.bf16.gmra.mrb[0].mxu0 %v399
    %v498 = vpop.f32.mrb[0].mxu0
    %v499 = vadd.f32 %v346, %v498
    %v500 = vpop.f32.mrb[0].mxu0
    %v501 = vpop.f32.mrb[0].mxu0
    %v502 = vadd.f32 %v350, %v501
    %v503 = vpop.f32.mrb[0].mxu0
    %504 = vdwg.mxu0
    %v505 = vld [vmem:[%s3] sm:$0x1]
    %v507 = vlaneseq
    %v508 = vshrl.u32 %v507, 7
    %v509 = vsub.s32 0, %v508
    %v510 = vrot.slane %v505, %v509
    %v512 = vmul.f32 %v443, %v510
    %v513 = vmul.f32 %v446, %v510
    %v514 = vmul.f32 %v451, %v510
    %v515 = vmul.f32 %v454, %v510
    %v516 = vmul.f32 %v459, %v510
    %v517 = vmul.f32 %v462, %v510
    %v518 = vmul.f32 %v467, %v510
    %v519 = vmul.f32 %v470, %v510
    %v520 = vmul.f32 %v475, %v510
    %v521 = vmul.f32 %v478, %v510
    %v522 = vmul.f32 %v483, %v510
    %v523 = vmul.f32 %v486, %v510
    %v524 = vmul.f32 %v491, %v510
    %v525 = vmul.f32 %v494, %v510
    %v526 = vmul.f32 %v499, %v510
    %v527 = vmul.f32 %v502, %v510
    %v528 = vld [vmem:[%s4] sm:$0x1]
    %v530 = vlaneseq
    %v531 = vshrl.u32 %v530, 7
    %v532 = vsub.s32 0, %v531
    %v533 = vrot.slane %v528, %v532
    %v535 = vadd.f32 %v512, %v533
    %v536 = vadd.f32 %v513, %v533
    %v537 = vadd.f32 %v514, %v533
    %v538 = vadd.f32 %v515, %v533
    %v539 = vadd.f32 %v516, %v533
    %v540 = vadd.f32 %v517, %v533
    %v541 = vadd.f32 %v518, %v533
    %v542 = vadd.f32 %v519, %v533
    %v543 = vadd.f32 %v520, %v533
    %v544 = vadd.f32 %v521, %v533
    %v545 = vadd.f32 %v522, %v533
    %v546 = vadd.f32 %v523, %v533
    %v547 = vadd.f32 %v524, %v533
    %v548 = vadd.f32 %v525, %v533
    %v549 = vadd.f32 %v526, %v533
    %v550 = vadd.f32 %v527, %v533
    %v551 = vmax.f32 %v535, 0.0
    %v552 = vmax.f32 %v536, 0.0
    %v553 = vmax.f32 %v537, 0.0
    %v554 = vmax.f32 %v538, 0.0
    %v555 = vmax.f32 %v539, 0.0
    %v556 = vmax.f32 %v540, 0.0
    %v557 = vmax.f32 %v541, 0.0
    %v558 = vmax.f32 %v542, 0.0
    %v559 = vmax.f32 %v543, 0.0
    %v560 = vmax.f32 %v544, 0.0
    %v561 = vmax.f32 %v545, 0.0
    %v562 = vmax.f32 %v546, 0.0
    %v563 = vmax.f32 %v547, 0.0
    %v564 = vmax.f32 %v548, 0.0
    %v565 = vmax.f32 %v549, 0.0
    %v566 = vmax.f32 %v550, 0.0
    %v567 = vpack.c.bf16 %v552, %v551
    %v568 = vpack.c.bf16 %v554, %v553
    %v569 = vpack.c.bf16 %v556, %v555
    %v570 = vpack.c.bf16 %v558, %v557
    %v571 = vpack.c.bf16 %v560, %v559
    %v572 = vpack.c.bf16 %v562, %v561
    %v573 = vpack.c.bf16 %v564, %v563
    %v574 = vpack.c.bf16 %v566, %v565
    %s575 = scalar_lea.vmem [#allocation7], 128
    %v576 = vld [vmem:[%s575] sm:$0xff]
    %v577 = vld [vmem:[%s575 + $0x8] sm:$0xff]
    %v578 = vld [vmem:[%s575 + $0x10] sm:$0xff]
    %v579 = vld [vmem:[%s575 + $0x18] sm:$0xff]
    %v580 = vld [vmem:[%s575 + $0x20] sm:$0xff]
    %v581 = vld [vmem:[%s575 + $0x28] sm:$0xff]
    %v582 = vld [vmem:[%s575 + $0x30] sm:$0xff]
    %v583 = vld [vmem:[%s575 + $0x38] sm:$0xff]
    %v584 = vld [vmem:[%s575 + $0x40] sm:$0xff]
    %v585 = vld [vmem:[%s575 + $0x48] sm:$0xff]
    %v586 = vld [vmem:[%s575 + $0x50] sm:$0xff]
    %v587 = vld [vmem:[%s575 + $0x58] sm:$0xff]
    %v588 = vld [vmem:[%s575 + $0x60] sm:$0xff]
    %v589 = vld [vmem:[%s575 + $0x68] sm:$0xff]
    %v590 = vld [vmem:[%s575 + $0x70] sm:$0xff]
    %v591 = vld [vmem:[%s575 + $0x78] sm:$0xff]
    %v608 = vunpack.c.l.b16 %v576
    %v609 = vunpack.c.h.b16 %v576
    %v610 = vunpack.c.l.b16 %v577
    %v611 = vunpack.c.h.b16 %v577
    %v612 = vunpack.c.l.b16 %v578
    %v613 = vunpack.c.h.b16 %v578
    %v614 = vunpack.c.l.b16 %v579
    %v615 = vunpack.c.h.b16 %v579
    %v616 = vunpack.c.l.b16 %v580
    %v617 = vunpack.c.h.b16 %v580
    %v618 = vunpack.c.l.b16 %v581
    %v619 = vunpack.c.h.b16 %v581
    %v620 = vunpack.c.l.b16 %v582
    %v621 = vunpack.c.h.b16 %v582
    %v622 = vunpack.c.l.b16 %v583
    %v623 = vunpack.c.h.b16 %v583
    %v624 = vunpack.c.l.b16 %v584
    %v625 = vunpack.c.h.b16 %v584
    %v626 = vunpack.c.l.b16 %v585
    %v627 = vunpack.c.h.b16 %v585
    %v628 = vunpack.c.l.b16 %v586
    %v629 = vunpack.c.h.b16 %v586
    %v630 = vunpack.c.l.b16 %v587
    %v631 = vunpack.c.h.b16 %v587
    %v632 = vunpack.c.l.b16 %v588
    %v633 = vunpack.c.h.b16 %v588
    %v634 = vunpack.c.l.b16 %v589
    %v635 = vunpack.c.h.b16 %v589
    %v636 = vunpack.c.l.b16 %v590
    %v637 = vunpack.c.h.b16 %v590
    %v638 = vunpack.c.l.b16 %v591
    %v639 = vunpack.c.h.b16 %v591
    %v640 = vpack.c.b16 %v610, %v608
    %v641 = vpack.c.b16 %v611, %v609
    %v642 = vpack.c.b16 %v614, %v612
    %v643 = vpack.c.b16 %v615, %v613
    %v644 = vpack.c.b16 %v618, %v616
    %v645 = vpack.c.b16 %v619, %v617
    %v646 = vpack.c.b16 %v622, %v620
    %v647 = vpack.c.b16 %v623, %v621
    %v648 = vpack.c.b16 %v626, %v624
    %v649 = vpack.c.b16 %v627, %v625
    %v650 = vpack.c.b16 %v630, %v628
    %v651 = vpack.c.b16 %v631, %v629
    %v652 = vpack.c.b16 %v634, %v632
    %v653 = vpack.c.b16 %v635, %v633
    %v654 = vpack.c.b16 %v638, %v636
    %v655 = vpack.c.b16 %v639, %v637
    %672 = vmatprep.subr.bf16.mxu0 %v641
    %673 = vmatpush1.bf16.msra.mxu0 %v640
    %674 = vmatprep.subr.bf16.mxu0 %v643
    %675 = vmatpush1.bf16.msra.mxu0 %v642
    %676 = vmatprep.subr.bf16.mxu0 %v645
    %677 = vmatpush1.bf16.msra.mxu0 %v644
    %678 = vmatprep.subr.bf16.mxu0 %v647
    %679 = vmatpush1.bf16.msra.mxu0 %v646
    %680 = vmatprep.subr.bf16.mxu0 %v649
    %681 = vmatpush1.bf16.msra.mxu0 %v648
    %682 = vmatprep.subr.bf16.mxu0 %v651
    %683 = vmatpush1.bf16.msra.mxu0 %v650
    %684 = vmatprep.subr.bf16.mxu0 %v653
    %685 = vmatpush1.bf16.msra.mxu0 %v652
    %686 = vmatprep.subr.bf16.mxu0 %v655
    %687 = vmatpush1.bf16.msra.mxu0 %v654
    %688 = vmatprep.subr.bf16.mxu0 0
    %689 = vmatpush1.bf16.msra.mxu0 0
    %690 = vmatprep.subr.bf16.mxu0 0
    %691 = vmatpush1.bf16.msra.mxu0 0
    %692 = vmatprep.subr.bf16.mxu0 0
    %693 = vmatpush1.bf16.msra.mxu0 0
    %694 = vmatprep.subr.bf16.mxu0 0
    %695 = vmatpush1.bf16.msra.mxu0 0
    %696 = vmatprep.subr.bf16.mxu0 0
    %697 = vmatpush1.bf16.msra.mxu0 0
    %698 = vmatprep.subr.bf16.mxu0 0
    %699 = vmatpush1.bf16.msra.mxu0 0
    %700 = vmatprep.subr.bf16.mxu0 0
    %701 = vmatpush1.bf16.msra.mxu0 0
    %702 = vmatprep.subr.bf16.mxu0 0
    %703 = vmatpush1.bf16.msra.mxu0 0
    %704 = vmatprep.mubr.bf16.mxu0 0
    %705 = vmatmul.mubr.bf16.gmra.mrb[0].mxu0 %v567
    %v706 = vpop.f32.mrb[0].mxu0
    %v707 = vadd.f32 0.0, %v706
    %v708 = vpop.f32.mrb[0].mxu0
    %v709 = vadd.f32 0.0, %v708
    %v710 = vpop.f32.mrb[0].mxu0
    %v711 = vadd.f32 0.0, %v710
    %v712 = vpop.f32.mrb[0].mxu0
    %v713 = vadd.f32 0.0, %v712
    %714 = vmatprep.mubr.bf16.mxu0 0
    %715 = vmatmul.mubr.bf16.gmra.mrb[0].mxu0 %v568
    %v716 = vpop.f32.mrb[0].mxu0
    %v717 = vadd.f32 0.0, %v716
    %v718 = vpop.f32.mrb[0].mxu0
    %v719 = vadd.f32 0.0, %v718
    %v720 = vpop.f32.mrb[0].mxu0
    %v721 = vadd.f32 0.0, %v720
    %v722 = vpop.f32.mrb[0].mxu0
    %v723 = vadd.f32 0.0, %v722
    %724 = vmatprep.mubr.bf16.mxu0 0
    %725 = vmatmul.mubr.bf16.gmra.mrb[0].mxu0 %v569
    %v726 = vpop.f32.mrb[0].mxu0
    %v727 = vadd.f32 0.0, %v726
    %v728 = vpop.f32.mrb[0].mxu0
    %v729 = vadd.f32 0.0, %v728
    %v730 = vpop.f32.mrb[0].mxu0
    %v731 = vadd.f32 0.0, %v730
    %v732 = vpop.f32.mrb[0].mxu0
    %v733 = vadd.f32 0.0, %v732
    %734 = vmatprep.mubr.bf16.mxu0 0
    %735 = vmatmul.mubr.bf16.gmra.mrb[0].mxu0 %v570
    %v736 = vpop.f32.mrb[0].mxu0
    %v737 = vadd.f32 0.0, %v736
    %v738 = vpop.f32.mrb[0].mxu0
    %v739 = vadd.f32 0.0, %v738
    %v740 = vpop.f32.mrb[0].mxu0
    %v741 = vadd.f32 0.0, %v740
    %v742 = vpop.f32.mrb[0].mxu0
    %v743 = vadd.f32 0.0, %v742
    %744 = vmatprep.mubr.bf16.mxu0 0
    %745 = vmatmul.mubr.bf16.gmra.mrb[0].mxu0 %v571
    %v746 = vpop.f32.mrb[0].mxu0
    %v747 = vadd.f32 0.0, %v746
    %v748 = vpop.f32.mrb[0].mxu0
    %v749 = vadd.f32 0.0, %v748
    %v750 = vpop.f32.mrb[0].mxu0
    %v751 = vadd.f32 0.0, %v750
    %v752 = vpop.f32.mrb[0].mxu0
    %v753 = vadd.f32 0.0, %v752
    %754 = vmatprep.mubr.bf16.mxu0 0
    %755 = vmatmul.mubr.bf16.gmra.mrb[0].mxu0 %v572
    %v756 = vpop.f32.mrb[0].mxu0
    %v757 = vadd.f32 0.0, %v756
    %v758 = vpop.f32.mrb[0].mxu0
    %v759 = vadd.f32 0.0, %v758
    %v760 = vpop.f32.mrb[0].mxu0
    %v761 = vadd.f32 0.0, %v760
    %v762 = vpop.f32.mrb[0].mxu0
    %v763 = vadd.f32 0.0, %v762
    %764 = vmatprep.mubr.bf16.mxu0 0
    %765 = vmatmul.mubr.bf16.gmra.mrb[0].mxu0 %v573
    %v766 = vpop.f32.mrb[0].mxu0
    %v767 = vadd.f32 0.0, %v766
    %v768 = vpop.f32.mrb[0].mxu0
    %v769 = vadd.f32 0.0, %v768
    %v770 = vpop.f32.mrb[0].mxu0
    %v771 = vadd.f32 0.0, %v770
    %v772 = vpop.f32.mrb[0].mxu0
    %v773 = vadd.f32 0.0, %v772
    %774 = vmatprep.mubr.bf16.mxu0 0
    %775 = vmatmul.mubr.bf16.gmra.mrb[0].mxu0 %v574
    %v776 = vpop.f32.mrb[0].mxu0
    %v777 = vadd.f32 0.0, %v776
    %v778 = vpop.f32.mrb[0].mxu0
    %v779 = vadd.f32 0.0, %v778
    %v780 = vpop.f32.mrb[0].mxu0
    %v781 = vadd.f32 0.0, %v780
    %v782 = vpop.f32.mrb[0].mxu0
    %v783 = vadd.f32 0.0, %v782
    %784 = vdwg.mxu0
    %v785 = vpack.c.bf16 %v711, %v707
    %v786 = vpack.c.bf16 %v721, %v717
    %v787 = vpack.c.bf16 %v731, %v727
    %v788 = vpack.c.bf16 %v741, %v737
    %v789 = vpack.c.bf16 %v751, %v747
    %v790 = vpack.c.bf16 %v761, %v757
    %v791 = vpack.c.bf16 %v771, %v767
    %v792 = vpack.c.bf16 %v781, %v777
    %793 = vmatprep.subr.bf16.mxu0 0
    %794 = vmatpush1.bf16.msra.mxu0 %v785
    %795 = vmatprep.subr.bf16.mxu0 0
    %796 = vmatpush1.bf16.msra.mxu0 %v786
    %797 = vmatprep.subr.bf16.mxu0 0
    %798 = vmatpush1.bf16.msra.mxu0 %v787
    %799 = vmatprep.subr.bf16.mxu0 0
    %800 = vmatpush1.bf16.msra.mxu0 %v788
    %801 = vmatprep.subr.bf16.mxu0 0
    %802 = vmatpush1.bf16.msra.mxu0 %v789
    %803 = vmatprep.subr.bf16.mxu0 0
    %804 = vmatpush1.bf16.msra.mxu0 %v790
    %805 = vmatprep.subr.bf16.mxu0 0
    %806 = vmatpush1.bf16.msra.mxu0 %v791
    %807 = vmatprep.subr.bf16.mxu0 0
    %808 = vmatpush1.bf16.msra.mxu0 %v792
    %809 = vmatprep.subr.bf16.mxu0 0
    %810 = vmatpush1.bf16.msra.mxu0 0
    %811 = vmatprep.subr.bf16.mxu0 0
    %812 = vmatpush1.bf16.msra.mxu0 0
    %813 = vmatprep.subr.bf16.mxu0 0
    %814 = vmatpush1.bf16.msra.mxu0 0
    %815 = vmatprep.subr.bf16.mxu0 0
    %816 = vmatpush1.bf16.msra.mxu0 0
    %817 = vmatprep.subr.bf16.mxu0 0
    %818 = vmatpush1.bf16.msra.mxu0 0
    %819 = vmatprep.subr.bf16.mxu0 0
    %820 = vmatpush1.bf16.msra.mxu0 0
    %821 = vmatprep.subr.bf16.mxu0 0
    %822 = vmatpush1.bf16.msra.mxu0 0
    %823 = vmatprep.subr.bf16.mxu0 0
    %824 = vmatpush1.bf16.msra.mxu0 0
    %825 = vmatprep.mubr.bf16.mxu0 0
    %826 = vmatmul.mubr.bf16.gmra.mrb[0].mxu0 %v392
    %v827 = vpop.f32.mrb[0].mxu0
    %v828 = vadd.f32 %v709, %v827
    %v829 = vpop.f32.mrb[0].mxu0
    %v830 = vpop.f32.mrb[0].mxu0
    %v831 = vadd.f32 %v713, %v830
    %v832 = vpop.f32.mrb[0].mxu0
    %833 = vmatprep.mubr.bf16.mxu0 0
    %834 = vmatmul.mubr.bf16.gmra.mrb[0].mxu0 %v393
    %v835 = vpop.f32.mrb[0].mxu0
    %v836 = vadd.f32 %v719, %v835
    %v837 = vpop.f32.mrb[0].mxu0
    %v838 = vpop.f32.mrb[0].mxu0
    %v839 = vadd.f32 %v723, %v838
    %v840 = vpop.f32.mrb[0].mxu0
    %841 = vmatprep.mubr.bf16.mxu0 0
    %842 = vmatmul.mubr.bf16.gmra.mrb[0].mxu0 %v394
    %v843 = vpop.f32.mrb[0].mxu0
    %v844 = vadd.f32 %v729, %v843
    %v845 = vpop.f32.mrb[0].mxu0
    %v846 = vpop.f32.mrb[0].mxu0
    %v847 = vadd.f32 %v733, %v846
    %v848 = vpop.f32.mrb[0].mxu0
    %849 = vmatprep.mubr.bf16.mxu0 0
    %850 = vmatmul.mubr.bf16.gmra.mrb[0].mxu0 %v395
    %v851 = vpop.f32.mrb[0].mxu0
    %v852 = vadd.f32 %v739, %v851
    %v853 = vpop.f32.mrb[0].mxu0
    %v854 = vpop.f32.mrb[0].mxu0
    %v855 = vadd.f32 %v743, %v854
    %v856 = vpop.f32.mrb[0].mxu0
    %857 = vmatprep.mubr.bf16.mxu0 0
    %858 = vmatmul.mubr.bf16.gmra.mrb[0].mxu0 %v396
    %v859 = vpop.f32.mrb[0].mxu0
    %v860 = vadd.f32 %v749, %v859
    %v861 = vpop.f32.mrb[0].mxu0
    %v862 = vpop.f32.mrb[0].mxu0
    %v863 = vadd.f32 %v753, %v862
    %v864 = vpop.f32.mrb[0].mxu0
    %865 = vmatprep.mubr.bf16.mxu0 0
    %866 = vmatmul.mubr.bf16.gmra.mrb[0].mxu0 %v397
    %v867 = vpop.f32.mrb[0].mxu0
    %v868 = vadd.f32 %v759, %v867
    %v869 = vpop.f32.mrb[0].mxu0
    %v870 = vpop.f32.mrb[0].mxu0
    %v871 = vadd.f32 %v763, %v870
    %v872 = vpop.f32.mrb[0].mxu0
    %873 = vmatprep.mubr.bf16.mxu0 0
    %874 = vmatmul.mubr.bf16.gmra.mrb[0].mxu0 %v398
    %v875 = vpop.f32.mrb[0].mxu0
    %v876 = vadd.f32 %v769, %v875
    %v877 = vpop.f32.mrb[0].mxu0
    %v878 = vpop.f32.mrb[0].mxu0
    %v879 = vadd.f32 %v773, %v878
    %v880 = vpop.f32.mrb[0].mxu0
    %881 = vmatprep.mubr.bf16.mxu0 0
    %882 = vmatmul.mubr.bf16.gmra.mrb[0].mxu0 %v399
    %v883 = vpop.f32.mrb[0].mxu0
    %v884 = vadd.f32 %v779, %v883
    %v885 = vpop.f32.mrb[0].mxu0
    %v886 = vpop.f32.mrb[0].mxu0
    %v887 = vadd.f32 %v783, %v886
    %v888 = vpop.f32.mrb[0].mxu0
    %889 = vdwg.mxu0
    %s890 = scalar_lea.vmem %s3, 1
    %v891 = vld [vmem:[%s890] sm:$0x1]
    %v893 = vlaneseq
    %v894 = vshrl.u32 %v893, 7
    %v895 = vsub.s32 0, %v894
    %v896 = vrot.slane %v891, %v895
    %v898 = vmul.f32 %v828, %v896
    %v899 = vmul.f32 %v831, %v896
    %v900 = vmul.f32 %v836, %v896
    %v901 = vmul.f32 %v839, %v896
    %v902 = vmul.f32 %v844, %v896
    %v903 = vmul.f32 %v847, %v896
    %v904 = vmul.f32 %v852, %v896
    %v905 = vmul.f32 %v855, %v896
    %v906 = vmul.f32 %v860, %v896
    %v907 = vmul.f32 %v863, %v896
    %v908 = vmul.f32 %v868, %v896
    %v909 = vmul.f32 %v871, %v896
    %v910 = vmul.f32 %v876, %v896
    %v911 = vmul.f32 %v879, %v896
    %v912 = vmul.f32 %v884, %v896
    %v913 = vmul.f32 %v887, %v896
    %s914 = scalar_lea.vmem %s4, 1
    %v915 = vld [vmem:[%s914] sm:$0x1]
    %v917 = vlaneseq
    %v918 = vshrl.u32 %v917, 7
    %v919 = vsub.s32 0, %v918
    %v920 = vrot.slane %v915, %v919
    %v922 = vadd.f32 %v898, %v920
    %v923 = vadd.f32 %v899, %v920
    %v924 = vadd.f32 %v900, %v920
    %v925 = vadd.f32 %v901, %v920
    %v926 = vadd.f32 %v902, %v920
    %v927 = vadd.f32 %v903, %v920
    %v928 = vadd.f32 %v904, %v920
    %v929 = vadd.f32 %v905, %v920
    %v930 = vadd.f32 %v906, %v920
    %v931 = vadd.f32 %v907, %v920
    %v932 = vadd.f32 %v908, %v920
    %v933 = vadd.f32 %v909, %v920
    %v934 = vadd.f32 %v910, %v920
    %v935 = vadd.f32 %v911, %v920
    %v936 = vadd.f32 %v912, %v920
    %v937 = vadd.f32 %v913, %v920
    %v938 = vmax.f32 %v922, 0.0
    %v939 = vmax.f32 %v923, 0.0
    %v940 = vmax.f32 %v924, 0.0
    %v941 = vmax.f32 %v925, 0.0
    %v942 = vmax.f32 %v926, 0.0
    %v943 = vmax.f32 %v927, 0.0
    %v944 = vmax.f32 %v928, 0.0
    %v945 = vmax.f32 %v929, 0.0
    %v946 = vmax.f32 %v930, 0.0
    %v947 = vmax.f32 %v931, 0.0
    %v948 = vmax.f32 %v932, 0.0
    %v949 = vmax.f32 %v933, 0.0
    %v950 = vmax.f32 %v934, 0.0
    %v951 = vmax.f32 %v935, 0.0
    %v952 = vmax.f32 %v936, 0.0
    %v953 = vmax.f32 %v937, 0.0
    %v954 = vpack.c.bf16 %v939, %v938
    %v955 = vpack.c.bf16 %v941, %v940
    %v956 = vpack.c.bf16 %v943, %v942
    %v957 = vpack.c.bf16 %v945, %v944
    %v958 = vpack.c.bf16 %v947, %v946
    %v959 = vpack.c.bf16 %v949, %v948
    %v960 = vpack.c.bf16 %v951, %v950
    %v961 = vpack.c.bf16 %v953, %v952
    %s962 = scalar_lea.vmem [#allocation7], 256
    %v963 = vld [vmem:[%s962] sm:$0xff]
    %v964 = vld [vmem:[%s962 + $0x8] sm:$0xff]
    %v965 = vld [vmem:[%s962 + $0x10] sm:$0xff]
    %v966 = vld [vmem:[%s962 + $0x18] sm:$0xff]
    %v967 = vld [vmem:[%s962 + $0x20] sm:$0xff]
    %v968 = vld [vmem:[%s962 + $0x28] sm:$0xff]
    %v969 = vld [vmem:[%s962 + $0x30] sm:$0xff]
    %v970 = vld [vmem:[%s962 + $0x38] sm:$0xff]
    %v971 = vld [vmem:[%s962 + $0x40] sm:$0xff]
    %v972 = vld [vmem:[%s962 + $0x48] sm:$0xff]
    %v973 = vld [vmem:[%s962 + $0x50] sm:$0xff]
    %v974 = vld [vmem:[%s962 + $0x58] sm:$0xff]
    %v975 = vld [vmem:[%s962 + $0x60] sm:$0xff]
    %v976 = vld [vmem:[%s962 + $0x68] sm:$0xff]
    %v977 = vld [vmem:[%s962 + $0x70] sm:$0xff]
    %v978 = vld [vmem:[%s962 + $0x78] sm:$0xff]
    %v995 = vunpack.c.l.b16 %v963
    %v996 = vunpack.c.h.b16 %v963
    %v997 = vunpack.c.l.b16 %v964
    %v998 = vunpack.c.h.b16 %v964
    %v999 = vunpack.c.l.b16 %v965
    %v1000 = vunpack.c.h.b16 %v965
    %v1001 = vunpack.c.l.b16 %v966
    %v1002 = vunpack.c.h.b16 %v966
    %v1003 = vunpack.c.l.b16 %v967
    %v1004 = vunpack.c.h.b16 %v967
    %v1005 = vunpack.c.l.b16 %v968
    %v1006 = vunpack.c.h.b16 %v968
    %v1007 = vunpack.c.l.b16 %v969
    %v1008 = vunpack.c.h.b16 %v969
    %v1009 = vunpack.c.l.b16 %v970
    %v1010 = vunpack.c.h.b16 %v970
    %v1011 = vunpack.c.l.b16 %v971
    %v1012 = vunpack.c.h.b16 %v971
    %v1013 = vunpack.c.l.b16 %v972
    %v1014 = vunpack.c.h.b16 %v972
    %v1015 = vunpack.c.l.b16 %v973
    %v1016 = vunpack.c.h.b16 %v973
    %v1017 = vunpack.c.l.b16 %v974
    %v1018 = vunpack.c.h.b16 %v974
    %v1019 = vunpack.c.l.b16 %v975
    %v1020 = vunpack.c.h.b16 %v975
    %v1021 = vunpack.c.l.b16 %v976
    %v1022 = vunpack.c.h.b16 %v976
    %v1023 = vunpack.c.l.b16 %v977
    %v1024 = vunpack.c.h.b16 %v977
    %v1025 = vunpack.c.l.b16 %v978
    %v1026 = vunpack.c.h.b16 %v978
    %v1027 = vpack.c.b16 %v997, %v995
    %v1028 = vpack.c.b16 %v998, %v996
    %v1029 = vpack.c.b16 %v1001, %v999
    %v1030 = vpack.c.b16 %v1002, %v1000
    %v1031 = vpack.c.b16 %v1005, %v1003
    %v1032 = vpack.c.b16 %v1006, %v1004
    %v1033 = vpack.c.b16 %v1009, %v1007
    %v1034 = vpack.c.b16 %v1010, %v1008
    %v1035 = vpack.c.b16 %v1013, %v1011
    %v1036 = vpack.c.b16 %v1014, %v1012
    %v1037 = vpack.c.b16 %v1017, %v1015
    %v1038 = vpack.c.b16 %v1018, %v1016
    %v1039 = vpack.c.b16 %v1021, %v1019
    %v1040 = vpack.c.b16 %v1022, %v1020
    %v1041 = vpack.c.b16 %v1025, %v1023
    %v1042 = vpack.c.b16 %v1026, %v1024
    %1059 = vmatprep.subr.bf16.mxu0 %v1028
    %1060 = vmatpush1.bf16.msra.mxu0 %v1027
    %1061 = vmatprep.subr.bf16.mxu0 %v1030
    %1062 = vmatpush1.bf16.msra.mxu0 %v1029
    %1063 = vmatprep.subr.bf16.mxu0 %v1032
    %1064 = vmatpush1.bf16.msra.mxu0 %v1031
    %1065 = vmatprep.subr.bf16.mxu0 %v1034
    %1066 = vmatpush1.bf16.msra.mxu0 %v1033
    %1067 = vmatprep.subr.bf16.mxu0 %v1036
    %1068 = vmatpush1.bf16.msra.mxu0 %v1035
    %1069 = vmatprep.subr.bf16.mxu0 %v1038
    %1070 = vmatpush1.bf16.msra.mxu0 %v1037
    %1071 = vmatprep.subr.bf16.mxu0 %v1040
    %1072 = vmatpush1.bf16.msra.mxu0 %v1039
    %1073 = vmatprep.subr.bf16.mxu0 %v1042
    %1074 = vmatpush1.bf16.msra.mxu0 %v1041
    %1075 = vmatprep.subr.bf16.mxu0 0
    %1076 = vmatpush1.bf16.msra.mxu0 0
    %1077 = vmatprep.subr.bf16.mxu0 0
    %1078 = vmatpush1.bf16.msra.mxu0 0
    %1079 = vmatprep.subr.bf16.mxu0 0
    %1080 = vmatpush1.bf16.msra.mxu0 0
    %1081 = vmatprep.subr.bf16.mxu0 0
    %1082 = vmatpush1.bf16.msra.mxu0 0
    %1083 = vmatprep.subr.bf16.mxu0 0
    %1084 = vmatpush1.bf16.msra.mxu0 0
    %1085 = vmatprep.subr.bf16.mxu0 0
    %1086 = vmatpush1.bf16.msra.mxu0 0
    %1087 = vmatprep.subr.bf16.mxu0 0
    %1088 = vmatpush1.bf16.msra.mxu0 0
    %1089 = vmatprep.subr.bf16.mxu0 0
    %1090 = vmatpush1.bf16.msra.mxu0 0
    %1091 = vmatprep.mubr.bf16.mxu0 0
    %1092 = vmatmul.mubr.bf16.gmra.mrb[0].mxu0 %v954
    %v1093 = vpop.f32.mrb[0].mxu0
    %v1094 = vadd.f32 0.0, %v1093
    %v1095 = vpop.f32.mrb[0].mxu0
    %v1096 = vadd.f32 0.0, %v1095
    %v1097 = vpop.f32.mrb[0].mxu0
    %v1098 = vadd.f32 0.0, %v1097
    %v1099 = vpop.f32.mrb[0].mxu0
    %v1100 = vadd.f32 0.0, %v1099
    %1101 = vmatprep.mubr.bf16.mxu0 0
    %1102 = vmatmul.mubr.bf16.gmra.mrb[0].mxu0 %v955
    %v1103 = vpop.f32.mrb[0].mxu0
    %v1104 = vadd.f32 0.0, %v1103
    %v1105 = vpop.f32.mrb[0].mxu0
    %v1106 = vadd.f32 0.0, %v1105
    %v1107 = vpop.f32.mrb[0].mxu0
    %v1108 = vadd.f32 0.0, %v1107
    %v1109 = vpop.f32.mrb[0].mxu0
    %v1110 = vadd.f32 0.0, %v1109
    %1111 = vmatprep.mubr.bf16.mxu0 0
    %1112 = vmatmul.mubr.bf16.gmra.mrb[0].mxu0 %v956
    %v1113 = vpop.f32.mrb[0].mxu0
    %v1114 = vadd.f32 0.0, %v1113
    %v1115 = vpop.f32.mrb[0].mxu0
    %v1116 = vadd.f32 0.0, %v1115
    %v1117 = vpop.f32.mrb[0].mxu0
    %v1118 = vadd.f32 0.0, %v1117
    %v1119 = vpop.f32.mrb[0].mxu0
    %v1120 = vadd.f32 0.0, %v1119
    %1121 = vmatprep.mubr.bf16.mxu0 0
    %1122 = vmatmul.mubr.bf16.gmra.mrb[0].mxu0 %v957
    %v1123 = vpop.f32.mrb[0].mxu0
    %v1124 = vadd.f32 0.0, %v1123
    %v1125 = vpop.f32.mrb[0].mxu0
    %v1126 = vadd.f32 0.0, %v1125
    %v1127 = vpop.f32.mrb[0].mxu0
    %v1128 = vadd.f32 0.0, %v1127
    %v1129 = vpop.f32.mrb[0].mxu0
    %v1130 = vadd.f32 0.0, %v1129
    %1131 = vmatprep.mubr.bf16.mxu0 0
    %1132 = vmatmul.mubr.bf16.gmra.mrb[0].mxu0 %v958
    %v1133 = vpop.f32.mrb[0].mxu0
    %v1134 = vadd.f32 0.0, %v1133
    %v1135 = vpop.f32.mrb[0].mxu0
    %v1136 = vadd.f32 0.0, %v1135
    %v1137 = vpop.f32.mrb[0].mxu0
    %v1138 = vadd.f32 0.0, %v1137
    %v1139 = vpop.f32.mrb[0].mxu0
    %v1140 = vadd.f32 0.0, %v1139
    %1141 = vmatprep.mubr.bf16.mxu0 0
    %1142 = vmatmul.mubr.bf16.gmra.mrb[0].mxu0 %v959
    %v1143 = vpop.f32.mrb[0].mxu0
    %v1144 = vadd.f32 0.0, %v1143
    %v1145 = vpop.f32.mrb[0].mxu0
    %v1146 = vadd.f32 0.0, %v1145
    %v1147 = vpop.f32.mrb[0].mxu0
    %v1148 = vadd.f32 0.0, %v1147
    %v1149 = vpop.f32.mrb[0].mxu0
    %v1150 = vadd.f32 0.0, %v1149
    %1151 = vmatprep.mubr.bf16.mxu0 0
    %1152 = vmatmul.mubr.bf16.gmra.mrb[0].mxu0 %v960
    %v1153 = vpop.f32.mrb[0].mxu0
    %v1154 = vadd.f32 0.0, %v1153
    %v1155 = vpop.f32.mrb[0].mxu0
    %v1156 = vadd.f32 0.0, %v1155
    %v1157 = vpop.f32.mrb[0].mxu0
    %v1158 = vadd.f32 0.0, %v1157
    %v1159 = vpop.f32.mrb[0].mxu0
    %v1160 = vadd.f32 0.0, %v1159
    %1161 = vmatprep.mubr.bf16.mxu0 0
    %1162 = vmatmul.mubr.bf16.gmra.mrb[0].mxu0 %v961
    %v1163 = vpop.f32.mrb[0].mxu0
    %v1164 = vadd.f32 0.0, %v1163
    %v1165 = vpop.f32.mrb[0].mxu0
    %v1166 = vadd.f32 0.0, %v1165
    %v1167 = vpop.f32.mrb[0].mxu0
    %v1168 = vadd.f32 0.0, %v1167
    %v1169 = vpop.f32.mrb[0].mxu0
    %v1170 = vadd.f32 0.0, %v1169
    %1171 = vdwg.mxu0
    %v1172 = vpack.c.bf16 %v1098, %v1094
    %v1173 = vpack.c.bf16 %v1108, %v1104
    %v1174 = vpack.c.bf16 %v1118, %v1114
    %v1175 = vpack.c.bf16 %v1128, %v1124
    %v1176 = vpack.c.bf16 %v1138, %v1134
    %v1177 = vpack.c.bf16 %v1148, %v1144
    %v1178 = vpack.c.bf16 %v1158, %v1154
    %v1179 = vpack.c.bf16 %v1168, %v1164
    %1180 = vmatprep.subr.bf16.mxu0 0
    %1181 = vmatpush1.bf16.msra.mxu0 %v1172
    %1182 = vmatprep.subr.bf16.mxu0 0
    %1183 = vmatpush1.bf16.msra.mxu0 %v1173
    %1184 = vmatprep.subr.bf16.mxu0 0
    %1185 = vmatpush1.bf16.msra.mxu0 %v1174
    %1186 = vmatprep.subr.bf16.mxu0 0
    %1187 = vmatpush1.bf16.msra.mxu0 %v1175
    %1188 = vmatprep.subr.bf16.mxu0 0
    %1189 = vmatpush1.bf16.msra.mxu0 %v1176
    %1190 = vmatprep.subr.bf16.mxu0 0
    %1191 = vmatpush1.bf16.msra.mxu0 %v1177
    %1192 = vmatprep.subr.bf16.mxu0 0
    %1193 = vmatpush1.bf16.msra.mxu0 %v1178
    %1194 = vmatprep.subr.bf16.mxu0 0
    %1195 = vmatpush1.bf16.msra.mxu0 %v1179
    %1196 = vmatprep.subr.bf16.mxu0 0
    %1197 = vmatpush1.bf16.msra.mxu0 0
    %1198 = vmatprep.subr.bf16.mxu0 0
    %1199 = vmatpush1.bf16.msra.mxu0 0
    %1200 = vmatprep.subr.bf16.mxu0 0
    %1201 = vmatpush1.bf16.msra.mxu0 0
    %1202 = vmatprep.subr.bf16.mxu0 0
    %1203 = vmatpush1.bf16.msra.mxu0 0
    %1204 = vmatprep.subr.bf16.mxu0 0
    %1205 = vmatpush1.bf16.msra.mxu0 0
    %1206 = vmatprep.subr.bf16.mxu0 0
    %1207 = vmatpush1.bf16.msra.mxu0 0
    %1208 = vmatprep.subr.bf16.mxu0 0
    %1209 = vmatpush1.bf16.msra.mxu0 0
    %1210 = vmatprep.subr.bf16.mxu0 0
    %1211 = vmatpush1.bf16.msra.mxu0 0
    %1212 = vmatprep.mubr.bf16.mxu0 0
    %1213 = vmatmul.mubr.bf16.gmra.mrb[0].mxu0 %v392
    %v1214 = vpop.f32.mrb[0].mxu0
    %v1215 = vadd.f32 %v1096, %v1214
    %v1216 = vpop.f32.mrb[0].mxu0
    %v1217 = vpop.f32.mrb[0].mxu0
    %v1218 = vadd.f32 %v1100, %v1217
    %v1219 = vpop.f32.mrb[0].mxu0
    %1220 = vmatprep.mubr.bf16.mxu0 0
    %1221 = vmatmul.mubr.bf16.gmra.mrb[0].mxu0 %v393
    %v1222 = vpop.f32.mrb[0].mxu0
    %v1223 = vadd.f32 %v1106, %v1222
    %v1224 = vpop.f32.mrb[0].mxu0
    %v1225 = vpop.f32.mrb[0].mxu0
    %v1226 = vadd.f32 %v1110, %v1225
    %v1227 = vpop.f32.mrb[0].mxu0
    %1228 = vmatprep.mubr.bf16.mxu0 0
    %1229 = vmatmul.mubr.bf16.gmra.mrb[0].mxu0 %v394
    %v1230 = vpop.f32.mrb[0].mxu0
    %v1231 = vadd.f32 %v1116, %v1230
    %v1232 = vpop.f32.mrb[0].mxu0
    %v1233 = vpop.f32.mrb[0].mxu0
    %v1234 = vadd.f32 %v1120, %v1233
    %v1235 = vpop.f32.mrb[0].mxu0
    %1236 = vmatprep.mubr.bf16.mxu0 0
    %1237 = vmatmul.mubr.bf16.gmra.mrb[0].mxu0 %v395
    %v1238 = vpop.f32.mrb[0].mxu0
    %v1239 = vadd.f32 %v1126, %v1238
    %v1240 = vpop.f32.mrb[0].mxu0
    %v1241 = vpop.f32.mrb[0].mxu0
    %v1242 = vadd.f32 %v1130, %v1241
    %v1243 = vpop.f32.mrb[0].mxu0
    %1244 = vmatprep.mubr.bf16.mxu0 0
    %1245 = vmatmul.mubr.bf16.gmra.mrb[0].mxu0 %v396
    %v1246 = vpop.f32.mrb[0].mxu0
    %v1247 = vadd.f32 %v1136, %v1246
    %v1248 = vpop.f32.mrb[0].mxu0
    %v1249 = vpop.f32.mrb[0].mxu0
    %v1250 = vadd.f32 %v1140, %v1249
    %v1251 = vpop.f32.mrb[0].mxu0
    %1252 = vmatprep.mubr.bf16.mxu0 0
    %1253 = vmatmul.mubr.bf16.gmra.mrb[0].mxu0 %v397
    %v1254 = vpop.f32.mrb[0].mxu0
    %v1255 = vadd.f32 %v1146, %v1254
    %v1256 = vpop.f32.mrb[0].mxu0
    %v1257 = vpop.f32.mrb[0].mxu0
    %v1258 = vadd.f32 %v1150, %v1257
    %v1259 = vpop.f32.mrb[0].mxu0
    %1260 = vmatprep.mubr.bf16.mxu0 0
    %1261 = vmatmul.mubr.bf16.gmra.mrb[0].mxu0 %v398
    %v1262 = vpop.f32.mrb[0].mxu0
    %v1263 = vadd.f32 %v1156, %v1262
    %v1264 = vpop.f32.mrb[0].mxu0
    %v1265 = vpop.f32.mrb[0].mxu0
    %v1266 = vadd.f32 %v1160, %v1265
    %v1267 = vpop.f32.mrb[0].mxu0
    %1268 = vmatprep.mubr.bf16.mxu0 0
    %1269 = vmatmul.mubr.bf16.gmra.mrb[0].mxu0 %v399
    %v1270 = vpop.f32.mrb[0].mxu0
    %v1271 = vadd.f32 %v1166, %v1270
    %v1272 = vpop.f32.mrb[0].mxu0
    %v1273 = vpop.f32.mrb[0].mxu0
    %v1274 = vadd.f32 %v1170, %v1273
    %v1275 = vpop.f32.mrb[0].mxu0
    %1276 = vdwg.mxu0
    %s1277 = scalar_lea.vmem %s3, 2
    %v1278 = vld [vmem:[%s1277] sm:$0x1]
    %v1280 = vlaneseq
    %v1281 = vshrl.u32 %v1280, 7
    %v1282 = vsub.s32 0, %v1281
    %v1283 = vrot.slane %v1278, %v1282
    %v1285 = vmul.f32 %v1215, %v1283
    %v1286 = vmul.f32 %v1218, %v1283
    %v1287 = vmul.f32 %v1223, %v1283
    %v1288 = vmul.f32 %v1226, %v1283
    %v1289 = vmul.f32 %v1231, %v1283
    %v1290 = vmul.f32 %v1234, %v1283
    %v1291 = vmul.f32 %v1239, %v1283
    %v1292 = vmul.f32 %v1242, %v1283
    %v1293 = vmul.f32 %v1247, %v1283
    %v1294 = vmul.f32 %v1250, %v1283
    %v1295 = vmul.f32 %v1255, %v1283
    %v1296 = vmul.f32 %v1258, %v1283
    %v1297 = vmul.f32 %v1263, %v1283
    %v1298 = vmul.f32 %v1266, %v1283
    %v1299 = vmul.f32 %v1271, %v1283
    %v1300 = vmul.f32 %v1274, %v1283
    %s1301 = scalar_lea.vmem %s4, 2
    %v1302 = vld [vmem:[%s1301] sm:$0x1]
    %v1304 = vlaneseq
    %v1305 = vshrl.u32 %v1304, 7
    %v1306 = vsub.s32 0, %v1305
    %v1307 = vrot.slane %v1302, %v1306
    %v1309 = vadd.f32 %v1285, %v1307
    %v1310 = vadd.f32 %v1286, %v1307
    %v1311 = vadd.f32 %v1287, %v1307
    %v1312 = vadd.f32 %v1288, %v1307
    %v1313 = vadd.f32 %v1289, %v1307
    %v1314 = vadd.f32 %v1290, %v1307
    %v1315 = vadd.f32 %v1291, %v1307
    %v1316 = vadd.f32 %v1292, %v1307
    %v1317 = vadd.f32 %v1293, %v1307
    %v1318 = vadd.f32 %v1294, %v1307
    %v1319 = vadd.f32 %v1295, %v1307
    %v1320 = vadd.f32 %v1296, %v1307
    %v1321 = vadd.f32 %v1297, %v1307
    %v1322 = vadd.f32 %v1298, %v1307
    %v1323 = vadd.f32 %v1299, %v1307
    %v1324 = vadd.f32 %v1300, %v1307
    %1325 = vst [vmem:[#allocation8] sm:$0xff] %v1309
    %1326 = vst [vmem:[#allocation8 + $0x8] sm:$0xff] %v1310
    %1327 = vst [vmem:[#allocation8 + $0x10] sm:$0xff] %v1311
    %1328 = vst [vmem:[#allocation8 + $0x18] sm:$0xff] %v1312
    %1329 = vst [vmem:[#allocation8 + $0x20] sm:$0xff] %v1313
    %1330 = vst [vmem:[#allocation8 + $0x28] sm:$0xff] %v1314
    %1331 = vst [vmem:[#allocation8 + $0x30] sm:$0xff] %v1315
    %1332 = vst [vmem:[#allocation8 + $0x38] sm:$0xff] %v1316
    %1333 = vst [vmem:[#allocation8 + $0x40] sm:$0xff] %v1317
    %1334 = vst [vmem:[#allocation8 + $0x48] sm:$0xff] %v1318
    %1335 = vst [vmem:[#allocation8 + $0x50] sm:$0xff] %v1319
    %1336 = vst [vmem:[#allocation8 + $0x58] sm:$0xff] %v1320
    %1337 = vst [vmem:[#allocation8 + $0x60] sm:$0xff] %v1321
    %1338 = vst [vmem:[#allocation8 + $0x68] sm:$0xff] %v1322
    %1339 = vst [vmem:[#allocation8 + $0x70] sm:$0xff] %v1323
    %1340 = vst [vmem:[#allocation8 + $0x78] sm:$0xff] %v1324
    // Predicated region
    $region34: #{sage_forward.1} parent=1 // pred_check
      _
    $region35: #{sage_forward.1} parent=1 // pred_check_branch
      %1342 = sbr.rel (0) target = $region37
    $region36: #{sage_forward.1} parent=1 // pred_region
      %s1344 = ssub.s32 2048, 2048
      %1345 = vsyncadd [#allocation4], %s1344
      %s1346 = sshll.u32 [#allocation8], 4
      %s1347 = int_to_ptr.vmem [resolvable:$true] %s1346
      %1352 = dma.vmem_to_hbm [thread:$0]  %s1347, 2048, %s5, [#allocation4], 128, 128, 8
    $region37: #{sage_forward.1} parent=1 // pred_fallthru
      _
    // Predicated region
    $region38: #{sage_forward.1} parent=1 // pred_check
      _
    $region39: #{sage_forward.1} parent=1 // pred_check_branch
      %1354 = sbr.rel (0) target = $region41
    $region40: #{sage_forward.1} parent=1 // pred_region
      %1355 = dma.done [#allocation4], 2048
    $region41: #{sage_forward.1} parent=1 // pred_fallthru
      _
    %1356 = vsyncpa [#allocation3], 1
    %1357 = vsyncpa [#allocation6], 1
    %1358 = vsyncpa [#allocation4], 1

</llo_original>
